<compile_context>
chip_gen: v7x
topology: tpu7x:2x2x1
jax: 0.10.0
libtpu: 0.0.40
codegen_flags: <defaults>
</compile_context>

<pallas_src>
import math

import numpy as np
import jax
import jax.numpy as jnp
from jax import lax
from jax.experimental import pallas as pl
from jax.experimental.pallas import tpu as pltpu

KH, KW = 3, 3


# ---------------------------------------------------------------------------- chip config
def _chip_config():
    """Returns (per-block byte budget, scoped-VMEM limit, TensorCore count)."""
    vmem_phys = 128 * 1024 * 1024
    try:
        info = pltpu.get_tpu_info()
        vmem_phys = int(getattr(info, "vmem_capacity_bytes", vmem_phys))
    except Exception:
        pass
    if vmem_phys <= 64 * 1024 * 1024:
        # v7x: 64 MiB VMEM / TC, 2 TCs.  Keep headroom for Mosaic internal scratch.
        return 4 * 1024 * 1024, 48 * 1024 * 1024, 2
    # v5e / v6e: 128 MiB VMEM, 1 TC.  Big tiles amortize the ~0.35us/step overhead.
    return 8 * 1024 * 1024, 64 * 1024 * 1024, 1


# -------------------------------------------------------------------- roll-direction probe
_ROLL_NP_LIKE = "unprobed"   # True: np.roll convention; False: reversed; None: unusable


def _probe_roll_direction():
    """One-time probe of pltpu.roll's sign convention on this backend.

    True  -> roll(x, s)[i] == x[(i - s) % n]  (np.roll convention)
    False -> roll(x, s)[i] == x[(i + s) % n]
    None  -> pltpu.roll unusable here; caller takes the fallback kernel.
    """
    global _ROLL_NP_LIKE
    if _ROLL_NP_LIKE != "unprobed":
        return _ROLL_NP_LIKE
    try:
        def probe_kernel(x_ref, o_ref):
            o_ref[...] = pltpu.roll(x_ref[...], shift=1, axis=1)

        x = jnp.broadcast_to(jnp.arange(128, dtype=jnp.float32), (8, 128))
        out = np.asarray(jax.block_until_ready(
            pl.pallas_call(
                probe_kernel,
                out_shape=jax.ShapeDtypeStruct((8, 128), jnp.float32))(x)))
        if out[0, 0] == 127.0 and out[0, 2] == 1.0:
            _ROLL_NP_LIKE = True
        elif out[0, 0] == 1.0 and out[0, 2] == 3.0:
            _ROLL_NP_LIKE = False
        else:
            _ROLL_NP_LIKE = None
    except Exception:
        _ROLL_NP_LIKE = None
    return _ROLL_NP_LIKE


# --------------------------------------------------------------------------------- kernels
def _make_roll_kernel(W, np_like):
    """Lane-dense flattened kernel: blocks are (bt, lt) with lt a multiple of W.

    out[p] = x[p] - x[p+1], except out[p] = x[p] at the last column of each image row
    (the zero column contributed by padding=1 on the right edge).
    """
    pow2 = (W & (W - 1)) == 0

    def kernel(x_ref, o_ref):
        x = x_ref[...]                                      # (bt, lt) full tile
        n = x.shape[-1]
        shift = (n - 1) if np_like else 1                   # "next element" rotation
        nxt = pltpu.roll(x, shift=shift, axis=x.ndim - 1)   # XLU lane rotate (free slot)
        col = lax.broadcasted_iota(jnp.int32, x.shape, x.ndim - 1)
        col_in_row = (col & (W - 1)) if pow2 else (col % W)  # blocks start at row bounds
        edge = col_in_row == (W - 1)                        # right image edge -> pad = 0
        xf = x.astype(jnp.float32)
        nf = jnp.where(edge, 0.0, nxt.astype(jnp.float32))
        o_ref[...] = (xf - nf).astype(o_ref.dtype)          # one unmasked lane-dense store

    return kernel


def _fallback_kernel(x_ref, o_ref):
    # Conservative path (only if pltpu.roll is unusable): ref-level static slices,
    # one full store + one (W-1)-wide store.  Known-good lowering.
    Wb = o_ref.shape[-1]
    o_ref[...] = x_ref[...]                                  # right edge: out = x
    o_ref[:, :, 0:Wb - 1] = (x_ref[:, :, 0:Wb - 1].astype(jnp.float32)
                             - x_ref[:, :, 1:Wb].astype(jnp.float32)).astype(o_ref.dtype)


# ----------------------------------------------------------------------------- tile picker
def _pick_tiles(NC, HW, W, itemsize, budget, n_cores):
    """Pick (bt, lt) block dims for the flattened (NC, HW) layout.

    Constraints: bt % 8 == 0 or bt == NC;  lt % 128 == 0 or lt == HW;  lt % W == 0
    (so every block starts at an image-row boundary and the in-block lane mask is exact).
    """
    unit = W * 128 // math.gcd(W, 128)                       # lcm(W, 128)

    def pick_lt(row_budget):
        if HW * itemsize <= row_budget or unit >= HW:
            return HW
        cap = max(unit, row_budget // (unit * itemsize) * unit)
        return min(HW // unit * unit, cap)

    if NC <= 8:
        bt = NC                                              # only legal sub-8 tile is "full"
        lt = pick_lt(max(unit * itemsize, budget // NC))
    else:
        lt = pick_lt(budget)
        bt = min(NC, max(1, budget // (lt * itemsize)))
        bt = min(NC, max(8, bt // 8 * 8))

    if n_cores > 1:
        # v7x megacore: target ~2 grid steps per TensorCore so DMA/compute can overlap.
        target = 2 * n_cores
        while pl.cdiv(NC, bt) * pl.cdiv(HW, lt) < target and lt > unit and unit < HW:
            lt = max(unit, (lt // 2) // unit * unit)
        while pl.cdiv(NC, bt) * pl.cdiv(HW, lt) < target and bt > 8:
            bt = max(8, (bt // 2) // 8 * 8)
    return bt, lt


# --------------------------------------------------------------------------------- wrapper
def conv_d314(x, weight):
    """x: (N, 1, H, W); weight: the module's fixed (1, 1, 3, 3) constant.

    Returns F.conv2d(x, weight, padding=1) for weight = [[0,0,0],[0,1,-1],[0,0,0]].
    """
    N, C, H, W = x.shape
    assert C == 1, "Conv_d314's fixed weight has a single in/out channel"

    w = np.asarray(weight, dtype=np.float32).reshape(KH, KW)
    expected = np.zeros((KH, KW), dtype=np.float32)
    expected[1, 1], expected[1, 2] = 1.0, -1.0
    assert np.array_equal(w, expected), "Conv_d314 weight is a fixed, non-trainable constant"

    NC, HW = N * C, H * W
    dtype = x.dtype
    itemsize = jnp.dtype(dtype).itemsize
    budget, vmem_limit, n_cores = _chip_config()
    cost = pl.CostEstimate(flops=NC * HW, transcendentals=0,
                           bytes_accessed=2 * NC * HW * itemsize)

    np_like = _probe_roll_direction()
    if np_like is not None:
        # Main path: lane-dense flattened layout, fused roll + mask + subtract.
        x2 = x.reshape(NC, HW)                               # free contiguous reshape
        bt, lt = _pick_tiles(NC, HW, W, itemsize, budget, n_cores)
        grid = (pl.cdiv(NC, bt), pl.cdiv(HW, lt))
        out = pl.pallas_call(
            _make_roll_kernel(W, np_like),
            out_shape=jax.ShapeDtypeStruct((NC, HW), dtype),
            grid=grid,
            in_specs=[pl.BlockSpec((bt, lt), lambda i, j: (i, j))],
            out_specs=pl.BlockSpec((bt, lt), lambda i, j: (i, j)),
            compiler_params=pltpu.CompilerParams(
                dimension_semantics=("parallel", "parallel"),
                vmem_limit_bytes=vmem_limit),
            cost_estimate=cost,
        )(x2)
        return out.reshape(N, C, H, W)

    # Fallback (pltpu.roll unusable on this build): native (NC, H, W) layout, batch-tiled.
    x3 = x.reshape(NC, H, W)
    if NC <= 8:
        bt = NC
    else:
        bt = min(NC, max(8, (budget // max(1, H * W * itemsize)) // 8 * 8))
    out = pl.pallas_call(
        _fallback_kernel,
        out_shape=jax.ShapeDtypeStruct((NC, H, W), dtype),
        grid=(pl.cdiv(NC, bt),),
        in_specs=[pl.BlockSpec((bt, H, W), lambda i: (i, 0, 0))],
        out_specs=pl.BlockSpec((bt, H, W), lambda i: (i, 0, 0)),
        compiler_params=pltpu.CompilerParams(
            dimension_semantics=("parallel",),
            vmem_limit_bytes=vmem_limit),
        cost_estimate=cost,
    )(x3)
    return out.reshape(N, C, H, W)


def make_weight():
    kernel = jnp.array([[0, 0, 0],
                        [0, 1, -1],
                        [0, 0, 0]], dtype=jnp.float32)
    return kernel.reshape(1, 1, KH, KW)


if __name__ == "__main__":
    key = jax.random.PRNGKey(0)
    N, C, H, W = 2, 1, 16, 16       # in/out channels fixed to 1 by the module's weight
    x = jax.random.normal(key, (N, C, H, W), dtype=jnp.float32)
    weight = make_weight()

    out = jax.block_until_ready(conv_d314(x, weight))

    # Reference: out[y, x] = in[y, x] - in[y, x+1] (zero padding on the right edge).
    shifted = jnp.pad(x[..., 1:], ((0, 0), (0, 0), (0, 0), (0, 1)))
    ref = x - shifted
    assert out.shape == (N, C, H, W)
    assert jnp.allclose(out, ref, atol=1e-5), "mismatch vs reference"

    print("KERNEL_OK")
</pallas_src>

<mosaic_0001>
module attributes {stable_mosaic.version = 11 : i64} {
  func.func @probe_kernel(%arg0: memref<8x128xf32, #tpu.memory_space<vmem>>, %arg1: memref<8x128xf32, #tpu.memory_space<vmem>>) attributes {dimension_semantics = [], scalar_prefetch = 0 : i64, scratch_operands = 0 : i64, tpu.core_type = #tpu.core_type<tc>} {
    %c0 = arith.constant 0 : index
    %c0_0 = arith.constant 0 : index
    %0 = vector.load %arg0[%c0, %c0_0] : memref<8x128xf32, #tpu.memory_space<vmem>>, vector<8x128xf32>
    %c1_i32 = arith.constant 1 : i32
    %1 = tpu.dynamic_rotate %0 by %c1_i32 dim 1 : vector<8x128xf32>, i32 -> vector<8x128xf32>
    %c0_1 = arith.constant 0 : index
    %c0_2 = arith.constant 0 : index
    %2 = vector.load %arg1[%c0_1, %c0_2] : memref<8x128xf32, #tpu.memory_space<vmem>>, vector<8x128xf32>
    tpu.vector_store %arg1[%c0_1, %c0_2], %1 {strides = array<i32>} : memref<8x128xf32, #tpu.memory_space<vmem>>, vector<8x128xf32>,
    return
  }
}

module attributes {stable_mosaic.version = 11 : i64} {
  func.func @_fallback_kernel(%arg0: i32, %arg1: memref<2x16x16xf32, #tpu.memory_space<vmem>>, %arg2: memref<2x16x16xf32, #tpu.memory_space<vmem>>) attributes {dimension_semantics = [#tpu.dimension_semantics<parallel>], iteration_bounds = array<i64: 1>, scalar_prefetch = 0 : i64, scratch_operands = 0 : i64, tpu.core_type = #tpu.core_type<tc>, window_params = [{transform_indices = @transform_0, window_bounds = array<i64: 2, 16, 16>}, {transform_indices = @transform_1, window_bounds = array<i64: 2, 16, 16>}]} {
    %c0 = arith.constant 0 : index
    %c0_0 = arith.constant 0 : index
    %c0_1 = arith.constant 0 : index
    %0 = vector.load %arg1[%c0, %c0_0, %c0_1] : memref<2x16x16xf32, #tpu.memory_space<vmem>>, vector<2x16x16xf32>
    %c0_2 = arith.constant 0 : index
    %c0_3 = arith.constant 0 : index
    %c0_4 = arith.constant 0 : index
    %1 = vector.load %arg2[%c0_2, %c0_3, %c0_4] : memref<2x16x16xf32, #tpu.memory_space<vmem>>, vector<2x16x16xf32>
    tpu.vector_store %arg2[%c0_2, %c0_3, %c0_4], %0 {strides = array<i32>} : memref<2x16x16xf32, #tpu.memory_space<vmem>>, vector<2x16x16xf32>,
    %c0_5 = arith.constant 0 : index
    %c0_6 = arith.constant 0 : index
    %c0_7 = arith.constant 0 : index
    %2 = vector.load %arg1[%c0_5, %c0_6, %c0_7] : memref<2x16x16xf32, #tpu.memory_space<vmem>>, vector<2x16x15xf32>
    %c0_8 = arith.constant 0 : index
    %c0_9 = arith.constant 0 : index
    %c1 = arith.constant 1 : index
    %3 = vector.load %arg1[%c0_8, %c0_9, %c1] : memref<2x16x16xf32, #tpu.memory_space<vmem>>, vector<2x16x15xf32>
    %4 = arith.subf %2, %3 : vector<2x16x15xf32>
    %c0_10 = arith.constant 0 : index
    %c0_11 = arith.constant 0 : index
    %c0_12 = arith.constant 0 : index
    %5 = vector.load %arg2[%c0_10, %c0_11, %c0_12] : memref<2x16x16xf32, #tpu.memory_space<vmem>>, vector<2x16x15xf32>
    tpu.vector_store %arg2[%c0_10, %c0_11, %c0_12], %4 {strides = array<i32>} : memref<2x16x16xf32, #tpu.memory_space<vmem>>, vector<2x16x15xf32>,
    return
  }
  func.func @transform_0(%arg0: i32) -> (i32, i32, i32) {
    %c0_i32 = arith.constant 0 : i32
    %c0_i32_0 = arith.constant 0 : i32
    %c0_i32_1 = arith.constant 0 : i32
    return %arg0, %c0_i32, %c0_i32_0 : i32, i32, i32
  }
  func.func @transform_1(%arg0: i32) -> (i32, i32, i32) {
    %c0_i32 = arith.constant 0 : i32
    %c0_i32_0 = arith.constant 0 : i32
    %c0_i32_1 = arith.constant 0 : i32
    return %arg0, %c0_i32, %c0_i32_0 : i32, i32, i32
  }
}

</mosaic_0001>

<llo_original>
// kernel: tpu_custom_call.1
$region0: #{tpu_custom_call.1}
  #allocation0 [shape = 'u32[]', space=smem, size = 0x4, offset = 0x4, fixed_abs, tag = 'smem constant byte address 0x4 - core index']
  #allocation1 [shape = 'u32[144,128]{1,0:T(1,128)}', space=vmem, size = 0x12000, scoped, tag = 'internal scratch']
  %s0 = inlined_call_operand.hbm [shape: f32[8,128], index: 0, kind: input, shape index: {}]
  %s1 = inlined_call_operand.hbm [shape: f32[8,128], index: 1, kind: output, shape index: {}]
  %s2 = sld [smem:[#allocation0]]
  $region18: #{tpu_custom_call.1} parent=0
    _
  %s4 = ssub.s32 1, %s2
  %s5 = scalar_select 0, %s4, %s2
  $region1: #{tpu_custom_call.1} parent=0
    #allocation2 [shape = 'u8[4096]{0}', space=vmem, size = 0x1000, scoped, tag = 'input window, operand 0, single buffered']
    #allocation3 [shape = 's32[1]{0}', space=sflag, size = 0x4, scoped, tag = 'scoped memory for tpu_custom_call.1']
    #allocation4 [shape = 's32[1]{0}', space=sflag, size = 0x4, scoped, tag = 'scoped memory for tpu_custom_call.1']
    #allocation5 [shape = 'u8[4096]{0}', space=vmem, size = 0x1000, scoped, tag = 'output window, operand 0, single buffered']
    %6 = vsyncpa [#allocation3], 0
    %7 = vsyncpa [#allocation4], 0
    // Predicated region
    $region2: #{tpu_custom_call.1} parent=1 // pred_check
      _
    $region3: #{tpu_custom_call.1} parent=1 // pred_check_branch
      %9 = sbr.rel (0) target = $region5
    $region4: #{tpu_custom_call.1} parent=1 // pred_region
      %s11 = ssub.s32 128, 128
      %12 = vsyncadd [#allocation3], %s11
      %s14 = sshll.u32 [#allocation2], 4
      %s15 = int_to_ptr.vmem [resolvable:$true] %s14
      %17 = dma.hbm_to_vmem [thread:$0]  %s0, 128, %s15, [#allocation3]
    $region5: #{tpu_custom_call.1} parent=1 // pred_fallthru
      _
    // Predicated region
    $region6: #{tpu_custom_call.1} parent=1 // pred_check
      _
    $region7: #{tpu_custom_call.1} parent=1 // pred_check_branch
      %19 = sbr.rel (0) target = $region9
    $region8: #{tpu_custom_call.1} parent=1 // pred_region
      %20 = dma.done [#allocation3], 128
    $region9: #{tpu_custom_call.1} parent=1 // pred_fallthru
      _
    %v21 = vld [vmem:[#allocation2] sm:$0xff]
    %22 = vrot.lane.b32.xlu0 %v21, 1
    %v23 = vpop.permute.xlu0 %22
    %24 = vst [vmem:[#allocation5] sm:$0xff] %v23
    // Predicated region
    $region10: #{tpu_custom_call.1} parent=1 // pred_check
      _
    $region11: #{tpu_custom_call.1} parent=1 // pred_check_branch
      %26 = sbr.rel (0) target = $region13
    $region12: #{tpu_custom_call.1} parent=1 // pred_region
      %s28 = ssub.s32 128, 128
      %29 = vsyncadd [#allocation4], %s28
      %s31 = sshll.u32 [#allocation5], 4
      %s32 = int_to_ptr.vmem [resolvable:$true] %s31
      %34 = dma.vmem_to_hbm [thread:$0]  %s32, 128, %s1, [#allocation4]
    $region13: #{tpu_custom_call.1} parent=1 // pred_fallthru
      _
    // Predicated region
    $region14: #{tpu_custom_call.1} parent=1 // pred_check
      _
    $region15: #{tpu_custom_call.1} parent=1 // pred_check_branch
      %36 = sbr.rel (0) target = $region17
    $region16: #{tpu_custom_call.1} parent=1 // pred_region
      %37 = dma.done [#allocation4], 128
    $region17: #{tpu_custom_call.1} parent=1 // pred_fallthru
      _
    %38 = vsyncpa [#allocation3], 1
    %39 = vsyncpa [#allocation4], 1

// kernel: tpu_custom_call.1
$region0: #{tpu_custom_call.1}
  #allocation0 [shape = 'u32[]', space=smem, size = 0x4, offset = 0x4, fixed_abs, tag = 'smem constant byte address 0x4 - core index']
  #allocation1 [shape = 'u32[144,128]{1,0:T(1,128)}', space=vmem, size = 0x12000, scoped, tag = 'internal scratch']
  %s0 = inlined_call_operand.hbm [shape: f32[2,16,16], index: 0, kind: input, shape index: {}]
  %s1 = inlined_call_operand.hbm [shape: f32[2,16,16], index: 1, kind: output, shape index: {}]
  %s2 = sld [smem:[#allocation0]]
  $region18: #{tpu_custom_call.1} parent=0
    _
  %s4 = ssub.s32 1, %s2
  %s5 = scalar_select 0, %s4, %s2
  $region1: #{tpu_custom_call.1} parent=0
    #allocation2 [shape = 'u8[16384]{0}', space=vmem, size = 0x4000, scoped, tag = 'input window, operand 0, single buffered']
    #allocation3 [shape = 's32[1]{0}', space=sflag, size = 0x4, scoped, tag = 'scoped memory for tpu_custom_call.1']
    #allocation4 [shape = 's32[1]{0}', space=sflag, size = 0x4, scoped, tag = 'scoped memory for tpu_custom_call.1']
    #allocation5 [shape = 'u8[16384]{0}', space=vmem, size = 0x4000, scoped, tag = 'output window, operand 0, single buffered']
    %6 = vsyncpa [#allocation3], 0
    %7 = vsyncpa [#allocation4], 0
    // Predicated region
    $region2: #{tpu_custom_call.1} parent=1 // pred_check
      _
    $region3: #{tpu_custom_call.1} parent=1 // pred_check_branch
      %9 = sbr.rel (0) target = $region5
    $region4: #{tpu_custom_call.1} parent=1 // pred_region
      %s11 = ssub.s32 512, 512
      %12 = vsyncadd [#allocation3], %s11
      %s13 = sshll.u32 [#allocation2], 4
      %s14 = int_to_ptr.vmem [resolvable:$true] %s13
      %19 = dma.hbm_to_vmem [thread:$0]  %s0, 512, %s14, [#allocation3], 128, 128, 8
    $region5: #{tpu_custom_call.1} parent=1 // pred_fallthru
      _
    // Predicated region
    $region6: #{tpu_custom_call.1} parent=1 // pred_check
      _
    $region7: #{tpu_custom_call.1} parent=1 // pred_check_branch
      %21 = sbr.rel (0) target = $region9
    $region8: #{tpu_custom_call.1} parent=1 // pred_region
      %22 = dma.done [#allocation3], 512
    $region9: #{tpu_custom_call.1} parent=1 // pred_fallthru
      _
    %v23 = vld [vmem:[#allocation2] sm:$0xff]
    %v24 = vld [vmem:[#allocation2 + $0x8] sm:$0xff]
    %v25 = vld [vmem:[#allocation2 + $0x10] sm:$0xff]
    %v26 = vld [vmem:[#allocation2 + $0x18] sm:$0xff]
    %vm27 = vcmask 130048
    %28 = vst.msk [vmem:[#allocation5] sm:$0xff] %vm27, %v23
    %29 = vst.msk [vmem:[#allocation5 + $0x8] sm:$0xff] %vm27, %v24
    %30 = vst.msk [vmem:[#allocation5 + $0x10] sm:$0xff] %vm27, %v25
    %31 = vst.msk [vmem:[#allocation5 + $0x18] sm:$0xff] %vm27, %v26
    %v32 = vld [vmem:[#allocation2] sm:$0xff]
    %v33 = vld [vmem:[#allocation2 + $0x8] sm:$0xff]
    %v34 = vld [vmem:[#allocation2 + $0x10] sm:$0xff]
    %v35 = vld [vmem:[#allocation2 + $0x18] sm:$0xff]
    %40 = vrot.lane.b32.xlu0 %v32, 127
    %v41 = vpop.permute.xlu0 %40
    %42 = vrot.lane.b32.xlu0 %v33, 127
    %v43 = vpop.permute.xlu0 %42
    %44 = vrot.lane.b32.xlu0 %v34, 127
    %v45 = vpop.permute.xlu0 %44
    %46 = vrot.lane.b32.xlu0 %v35, 127
    %v47 = vpop.permute.xlu0 %46
    %v52 = vsub.f32 %v32, %v41
    %v53 = vsub.f32 %v33, %v43
    %v54 = vsub.f32 %v34, %v45
    %v55 = vsub.f32 %v35, %v47
    %vm56 = vcmask 121856
    %57 = vst.msk [vmem:[#allocation5] sm:$0xff] %vm56, %v52
    %58 = vst.msk [vmem:[#allocation5 + $0x8] sm:$0xff] %vm56, %v53
    %59 = vst.msk [vmem:[#allocation5 + $0x10] sm:$0xff] %vm56, %v54
    %60 = vst.msk [vmem:[#allocation5 + $0x18] sm:$0xff] %vm56, %v55
    // Predicated region
    $region10: #{tpu_custom_call.1} parent=1 // pred_check
      _
    $region11: #{tpu_custom_call.1} parent=1 // pred_check_branch
      %62 = sbr.rel (0) target = $region13
    $region12: #{tpu_custom_call.1} parent=1 // pred_region
      %s64 = ssub.s32 512, 512
      %65 = vsyncadd [#allocation4], %s64
      %s66 = sshll.u32 [#allocation5], 4
      %s67 = int_to_ptr.vmem [resolvable:$true] %s66
      %72 = dma.vmem_to_hbm [thread:$0]  %s67, 512, %s1, [#allocation4], 128, 128, 8
    $region13: #{tpu_custom_call.1} parent=1 // pred_fallthru
      _
    // Predicated region
    $region14: #{tpu_custom_call.1} parent=1 // pred_check
      _
    $region15: #{tpu_custom_call.1} parent=1 // pred_check_branch
      %74 = sbr.rel (0) target = $region17
    $region16: #{tpu_custom_call.1} parent=1 // pred_region
      %75 = dma.done [#allocation4], 512
    $region17: #{tpu_custom_call.1} parent=1 // pred_fallthru
      _
    %76 = vsyncpa [#allocation3], 1
    %77 = vsyncpa [#allocation4], 1

</llo_original>
